<compile_context>
chip_gen: v5e
topology: v5e:2x2
jax: 0.10.0
libtpu: 0.0.40
codegen_flags: <defaults>
</compile_context>

<pallas_src>
import math

import jax
import jax.numpy as jnp
from jax import lax
from jax.experimental import pallas as pl
from jax.experimental.pallas import tpu as pltpu

_INV_SQRT2 = 1.0 / math.sqrt(2.0)


def _round_up(v, m):
    return (v + m - 1) // m * m


def _cdiv(a, b):
    return (a + b - 1) // b


def _maybe_downcast(h, w_dtype):
    # Only narrow the GELU activations for true low-precision float weights
    # (bf16 / fp16) so the second matmul stays a packed MXU op.  int8 / fp8
    # would require an explicit scaling scheme, so those stay in f32.
    if jnp.dtype(w_dtype) in (jnp.dtype(jnp.bfloat16), jnp.dtype(jnp.float16)):
        return h.astype(w_dtype)
    return h


def _mlp_kernel_single(x_ref, w1_ref, b1_ref, w2_ref, b2_ref, o_ref):
    """Whole hidden dim resident: fc1 -> GELU -> fc2 + bias, no accumulator."""
    h = jnp.dot(x_ref[...], w1_ref[...], preferred_element_type=jnp.float32)
    h = h + b1_ref[...]
    h = 0.5 * h * (1.0 + lax.erf(h * _INV_SQRT2))  # exact (erf) GELU == nn.GELU default
    # Dropout(p=0.0) is identity -> no-op.
    h = _maybe_downcast(h, w2_ref.dtype)
    o_ref[...] = (jnp.dot(h, w2_ref[...], preferred_element_type=jnp.float32)
                  + b2_ref[...]).astype(o_ref.dtype)


def _mlp_kernel_tiled(x_ref, w1_ref, b1_ref, w2_ref, b2_ref, o_ref, acc_ref):
    """Hidden dim tiled: accumulate partial fc2 products in f32 scratch."""
    hi = pl.program_id(1)

    @pl.when(hi == 0)
    def _():
        acc_ref[...] = jnp.zeros_like(acc_ref)

    h = jnp.dot(x_ref[...], w1_ref[...], preferred_element_type=jnp.float32)
    h = h + b1_ref[...]
    h = 0.5 * h * (1.0 + lax.erf(h * _INV_SQRT2))
    h = _maybe_downcast(h, w2_ref.dtype)
    acc_ref[...] += jnp.dot(h, w2_ref[...], preferred_element_type=jnp.float32)

    @pl.when(hi == pl.num_programs(1) - 1)
    def _():
        o_ref[...] = (acc_ref[...] + b2_ref[...]).astype(o_ref.dtype)


def _vmem_capacity_bytes():
    default = 64 * 2**20  # conservative: v7x per-TensorCore VMEM
    try:
        info = pltpu.get_tpu_info()
        cap = int(getattr(info, "vmem_capacity_bytes", 0) or 0)
        return cap if cap > 0 else default
    except Exception:
        return default


def _select_tiles(M, C, H, O, x_item, w_item, budget, row_tile, hidden_tile, pack):
    def est(tm, th, multi):
        e = 2 * (tm * C + tm * O) * x_item            # double-buffered x / out tiles
        e += 2 * (C * th + th + th * O + O) * w_item  # double-buffered weight/bias tiles
        e += tm * th * 4                              # fc1/GELU f32 intermediate (single)
        if multi:
            e += tm * O * 4                           # f32 accumulator scratch
        return e

    # Hidden tile: prefer keeping all of H resident so weights are DMA'd once.
    if hidden_tile is not None:
        th = hidden_tile
        assert H % th == 0 and (th == H or th % 128 == 0)
    elif est(min(256, _round_up(M, pack)), H, False) <= budget:
        th = H
    else:
        th = None
        for cand in (1024, 512, 256, 128):   # >=256 preferred for the 256-wide MXU
            if H % cand == 0 and est(min(512, _round_up(M, pack)), cand, True) <= budget:
                th = cand
                break
        if th is None:
            th = 128 if H % 128 == 0 else H

    # Row tile: larger when weights are re-streamed (th < H) to raise
    # flops-per-weight-byte; rounded to the dtype's sublane packing.
    if row_tile is not None:
        tm = _round_up(row_tile, pack)
    else:
        tm_target = 256 if th == H else 512
        tm = min(tm_target, _round_up(M, pack))
        while tm > pack and est(tm, th, th != H) > budget:
            tm = _round_up(tm // 2, pack)
        # Ensure the "parallel" row axis has >= 2 steps so both v7x
        # TensorCores get work even for small M.
        if M > pack and _cdiv(M, tm) < 2:
            tm = _round_up(_cdiv(M, 2), pack)

    return tm, th, est(tm, th, th != H)


def mlp_forward(x, w1, b1, w2, b2, *, row_tile=None, hidden_tile=None):
    """x: [..., C] channels-last. w1: (C, H), b1: (H,), w2: (H, O), b2: (O,)."""
    orig_shape = x.shape
    C = orig_shape[-1]
    H = w1.shape[1]
    O = w2.shape[1]
    M = math.prod(orig_shape[:-1]) if len(orig_shape) > 1 else 1

    x_item = jnp.dtype(x.dtype).itemsize
    w_item = jnp.dtype(w1.dtype).itemsize
    pack = max(8, 32 // max(x_item, 1))       # sublane packing: 8 / 16 / 32 (f32 / bf16 / 8-bit)

    vmem_cap = _vmem_capacity_bytes()
    budget = int(vmem_cap * 0.75)             # leave headroom for compiler internal scratch

    tm, th, est = _select_tiles(M, C, H, O, x_item, w_item, budget,
                                row_tile, hidden_tile, pack)

    x2d = x.reshape(M, C)
    b1_2d = b1.reshape(1, H)
    b2_2d = b2.reshape(1, O)

    n_row = _cdiv(M, tm)   # ragged last row block: reads clamped, writes masked by Pallas
    n_hid = H // th

    weight_passes = 1 if th == H else n_row
    cost = pl.CostEstimate(
        flops=2 * M * C * H + 2 * M * H * O,
        transcendentals=M * H,
        bytes_accessed=(M * C + M * O) * x_item
        + weight_passes * (C * H + H + H * O + O) * w_item,
    )
    vmem_limit = int(min(max(est * 1.25, 16 * 2**20), vmem_cap))

    if n_hid == 1:
        # Fast path: weights resident, no accumulator traffic.
        grid = (n_row,)
        in_specs = [
            pl.BlockSpec((tm, C), lambda i: (i, 0)),   # x row tile
            pl.BlockSpec((C, H), lambda i: (0, 0)),    # fc1 weight (resident)
            pl.BlockSpec((1, H), lambda i: (0, 0)),    # fc1 bias
            pl.BlockSpec((H, O), lambda i: (0, 0)),    # fc2 weight (resident)
            pl.BlockSpec((1, O), lambda i: (0, 0)),    # fc2 bias
        ]
        out_specs = pl.BlockSpec((tm, O), lambda i: (i, 0))
        scratch_shapes = []
        kernel = _mlp_kernel_single
        dims = ("parallel",)
    else:
        grid = (n_row, n_hid)
        in_specs = [
            pl.BlockSpec((tm, C), lambda i, h: (i, 0)),   # x row tile
            pl.BlockSpec((C, th), lambda i, h: (0, h)),   # fc1 weight column tile
            pl.BlockSpec((1, th), lambda i, h: (0, h)),   # fc1 bias tile
            pl.BlockSpec((th, O), lambda i, h: (h, 0)),   # fc2 weight row tile
            pl.BlockSpec((1, O), lambda i, h: (0, 0)),    # fc2 bias
        ]
        out_specs = pl.BlockSpec((tm, O), lambda i, h: (i, 0))
        scratch_shapes = [pltpu.VMEM((tm, O), jnp.float32)]
        kernel = _mlp_kernel_tiled
        dims = ("parallel", "arbitrary")

    out2d = pl.pallas_call(
        kernel,
        out_shape=jax.ShapeDtypeStruct((M, O), x.dtype),
        grid_spec=pltpu.PrefetchScalarGridSpec(
            num_scalar_prefetch=0,
            grid=grid,
            in_specs=in_specs,
            out_specs=out_specs,
            scratch_shapes=scratch_shapes,
        ),
        compiler_params=pltpu.CompilerParams(
            dimension_semantics=dims,
            vmem_limit_bytes=vmem_limit,
        ),
        cost_estimate=cost,
    )(x2d, w1, b1_2d, w2, b2_2d)

    return out2d.reshape(*orig_shape[:-1], O)


if __name__ == "__main__":
    # Small shapes consistent with Mlp's forward: x is [B, N, C]
    B, N = 2, 8
    in_features = 16
    hidden_features = 32
    out_features = in_features  # out_features defaults to in_features

    key = jax.random.PRNGKey(0)
    kx, kw1, kb1, kw2, kb2 = jax.random.split(key, 5)

    x = jax.random.normal(kx, (B, N, in_features), dtype=jnp.float32)

    # Deterministic parameter init (Kaiming-uniform-like bounds, like nn.Linear)
    bound1 = 1.0 / math.sqrt(in_features)
    w1 = jax.random.uniform(kw1, (in_features, hidden_features),
                            minval=-bound1, maxval=bound1, dtype=jnp.float32)
    b1 = jax.random.uniform(kb1, (hidden_features,),
                            minval=-bound1, maxval=bound1, dtype=jnp.float32)

    bound2 = 1.0 / math.sqrt(hidden_features)
    w2 = jax.random.uniform(kw2, (hidden_features, out_features),
                            minval=-bound2, maxval=bound2, dtype=jnp.float32)
    b2 = jax.random.uniform(kb2, (out_features,),
                            minval=-bound2, maxval=bound2, dtype=jnp.float32)

    out = mlp_forward(x, w1, b1, w2, b2)
    out = jax.block_until_ready(out)

    # Reference check in plain JAX (same math: Linear -> exact GELU -> Linear)
    h_ref = x @ w1 + b1
    h_ref = 0.5 * h_ref * (1.0 + lax.erf(h_ref / math.sqrt(2.0)))
    ref = h_ref @ w2 + b2
    assert out.shape == (B, N, out_features)
    assert jnp.allclose(out, ref, atol=1e-5, rtol=1e-5)

    print("KERNEL_OK")
</pallas_src>

<mosaic_0001>
module attributes {stable_mosaic.version = 11 : i64} {
  func.func @_mlp_kernel_single(%arg0: i32, %arg1: memref<8x16xf32, #tpu.memory_space<vmem>>, %arg2: memref<16x32xf32, #tpu.memory_space<vmem>>, %arg3: memref<1x32xf32, #tpu.memory_space<vmem>>, %arg4: memref<32x16xf32, #tpu.memory_space<vmem>>, %arg5: memref<1x16xf32, #tpu.memory_space<vmem>>, %arg6: memref<8x16xf32, #tpu.memory_space<vmem>>) attributes {dimension_semantics = [#tpu.dimension_semantics<parallel>], iteration_bounds = array<i64: 2>, scalar_prefetch = 0 : i64, scratch_operands = 0 : i64, tpu.core_type = #tpu.core_type<tc>, window_params = [{transform_indices = @transform_0, window_bounds = array<i64: 8, 16>}, {pipeline_mode = #tpu.pipeline_mode<synchronous>, transform_indices = @transform_1, window_bounds = array<i64: 16, 32>}, {pipeline_mode = #tpu.pipeline_mode<synchronous>, transform_indices = @transform_2, window_bounds = array<i64: 1, 32>}, {pipeline_mode = #tpu.pipeline_mode<synchronous>, transform_indices = @transform_3, window_bounds = array<i64: 32, 16>}, {pipeline_mode = #tpu.pipeline_mode<synchronous>, transform_indices = @transform_4, window_bounds = array<i64: 1, 16>}, {transform_indices = @transform_5, window_bounds = array<i64: 8, 16>}]} {
    %c0 = arith.constant 0 : index
    %c0_0 = arith.constant 0 : index
    %0 = vector.load %arg1[%c0, %c0_0] : memref<8x16xf32, #tpu.memory_space<vmem>>, vector<8x16xf32>
    %c0_1 = arith.constant 0 : index
    %c0_2 = arith.constant 0 : index
    %1 = vector.load %arg2[%c0_1, %c0_2] : memref<16x32xf32, #tpu.memory_space<vmem>>, vector<16x32xf32>
    %cst = arith.constant dense<0.000000e+00> : vector<8x32xf32>
    %2 = tpu.matmul %0, %1, %cst {dimension_numbers = #tpu.dot_dimension_numbers<[1], [0], [0], [1], [0, 0, 1, 1], [], []>} : vector<8x16xf32>, vector<16x32xf32>, vector<8x32xf32> -> vector<8x32xf32>
    %c0_3 = arith.constant 0 : index
    %c0_4 = arith.constant 0 : index
    %3 = vector.load %arg3[%c0_3, %c0_4] : memref<1x32xf32, #tpu.memory_space<vmem>>, vector<1x32xf32>
    %4 = vector.broadcast %3 : vector<1x32xf32> to vector<8x32xf32>
    %5 = arith.addf %2, %4 : vector<8x32xf32>
    %cst_5 = arith.constant 5.000000e-01 : f32
    %6 = vector.broadcast %cst_5 : f32 to vector<8x32xf32>
    %7 = arith.mulf %6, %5 : vector<8x32xf32>
    %cst_6 = arith.constant 0.707106769 : f32
    %8 = vector.broadcast %cst_6 : f32 to vector<8x32xf32>
    %9 = arith.mulf %5, %8 : vector<8x32xf32>
    %10 = math.erf %9 : vector<8x32xf32>
    %cst_7 = arith.constant 1.000000e+00 : f32
    %11 = vector.broadcast %cst_7 : f32 to vector<8x32xf32>
    %12 = arith.addf %11, %10 : vector<8x32xf32>
    %13 = arith.mulf %7, %12 : vector<8x32xf32>
    %c0_8 = arith.constant 0 : index
    %c0_9 = arith.constant 0 : index
    %14 = vector.load %arg4[%c0_8, %c0_9] : memref<32x16xf32, #tpu.memory_space<vmem>>, vector<32x16xf32>
    %cst_10 = arith.constant dense<0.000000e+00> : vector<8x16xf32>
    %15 = tpu.matmul %13, %14, %cst_10 {dimension_numbers = #tpu.dot_dimension_numbers<[1], [0], [0], [1], [0, 0, 1, 1], [], []>} : vector<8x32xf32>, vector<32x16xf32>, vector<8x16xf32> -> vector<8x16xf32>
    %c0_11 = arith.constant 0 : index
    %c0_12 = arith.constant 0 : index
    %16 = vector.load %arg5[%c0_11, %c0_12] : memref<1x16xf32, #tpu.memory_space<vmem>>, vector<1x16xf32>
    %17 = vector.broadcast %16 : vector<1x16xf32> to vector<8x16xf32>
    %18 = arith.addf %15, %17 : vector<8x16xf32>
    %c0_13 = arith.constant 0 : index
    %c0_14 = arith.constant 0 : index
    %19 = vector.load %arg6[%c0_13, %c0_14] : memref<8x16xf32, #tpu.memory_space<vmem>>, vector<8x16xf32>
    tpu.vector_store %arg6[%c0_13, %c0_14], %18 {strides = array<i32>} : memref<8x16xf32, #tpu.memory_space<vmem>>, vector<8x16xf32>,
    return
  }
  func.func @transform_0(%arg0: i32) -> (i32, i32) {
    %c0_i32 = arith.constant 0 : i32
    %c0_i32_0 = arith.constant 0 : i32
    return %arg0, %c0_i32 : i32, i32
  }
  func.func @transform_1(%arg0: i32) -> (i32, i32) {
    %c0_i32 = arith.constant 0 : i32
    %c0_i32_0 = arith.constant 0 : i32
    %c0_i32_1 = arith.constant 0 : i32
    return %c0_i32, %c0_i32_0 : i32, i32
  }
  func.func @transform_2(%arg0: i32) -> (i32, i32) {
    %c0_i32 = arith.constant 0 : i32
    %c0_i32_0 = arith.constant 0 : i32
    %c0_i32_1 = arith.constant 0 : i32
    return %c0_i32, %c0_i32_0 : i32, i32
  }
  func.func @transform_3(%arg0: i32) -> (i32, i32) {
    %c0_i32 = arith.constant 0 : i32
    %c0_i32_0 = arith.constant 0 : i32
    %c0_i32_1 = arith.constant 0 : i32
    return %c0_i32, %c0_i32_0 : i32, i32
  }
  func.func @transform_4(%arg0: i32) -> (i32, i32) {
    %c0_i32 = arith.constant 0 : i32
    %c0_i32_0 = arith.constant 0 : i32
    %c0_i32_1 = arith.constant 0 : i32
    return %c0_i32, %c0_i32_0 : i32, i32
  }
  func.func @transform_5(%arg0: i32) -> (i32, i32) {
    %c0_i32 = arith.constant 0 : i32
    %c0_i32_0 = arith.constant 0 : i32
    return %arg0, %c0_i32 : i32, i32
  }
}

</mosaic_0001>

<llo_original>
// kernel: tpu_custom_call.1
$region0: #{tpu_custom_call.1}
  #allocation0 [shape = 'u32[]', space=smem, size = 0x4, offset = 0x4, fixed_abs, tag = 'smem constant byte address 0x4 - core index']
  #allocation1 [shape = 'u32[72,128]{1,0:T(1,128)}', space=vmem, size = 0x9000, scoped, tag = 'internal scratch']
  %s0 = inlined_call_operand.vmem [shape: f32[16,16], index: 0, kind: input, shape index: {}]
  %s1 = inlined_call_operand.vmem [shape: f32[16,32], index: 1, kind: input, shape index: {}]
  %s2 = inlined_call_operand.vmem [shape: f32[1,32], index: 2, kind: input, shape index: {}]
  %s3 = inlined_call_operand.vmem [shape: f32[32,16], index: 3, kind: input, shape index: {}]
  %s4 = inlined_call_operand.vmem [shape: f32[1,16], index: 4, kind: input, shape index: {}]
  %s5 = inlined_call_operand.hbm [shape: f32[16,16], index: 5, kind: output, shape index: {}]
  %s6 = sld [smem:[#allocation0]]
  $region53: #{tpu_custom_call.1} parent=0
    _
  %s8 = ssub.s32 1, %s6
  %s9 = scalar_select 0, %s8, %s6
  $region1: #{tpu_custom_call.1} parent=0
    #allocation2 [shape = 'u8[8192]{0}', space=vmem, size = 0x2000, scoped, tag = 'output window, operand 0']
    #allocation3 [shape = 's32[2]{0}', space=sflag, size = 0x8, scoped, tag = 'scoped memory for tpu_custom_call.1']
    %10 = vsyncpa [#allocation3], 0
    %s11 = scalar_lea.sflag [#allocation3], 1
    %12 = vsyncpa %s11, 0
    loop: start=0, step=1, limit=4
    $region2: #{tpu_custom_call.1} parent=1 // loop_pre_header
      _
    $region3: #{tpu_custom_call.1} parent=1 // loop_header
      %s14 = sphi 0, %s18
      %p15 = scmp.ge.s32.totalorder %s14, 4
      %s24 = sphi 0, %s26
      %s27 = sphi 0, %s24
      %s28 = sphi 0, %s27
      %s44 = sphi 0, %s28
      %s48 = sphi 0, %s48
      %s50 = sphi 0, %s48
      %s51 = sphi 0, %s50
      %s65 = sphi 0, %s51
      %s69 = sphi 0, %s69
      %s71 = sphi 0, %s69
      %s72 = sphi 0, %s71
      %s86 = sphi 0, %s72
      %s90 = sphi 0, %s90
      %s92 = sphi 0, %s90
      %s93 = sphi 0, %s92
      %s107 = sphi 0, %s93
      %s111 = sphi 0, %s111
      %s113 = sphi 0, %s111
      %s114 = sphi 0, %s113
      %s128 = sphi 0, %s114
      %s134 = sphi 0, %s136
      %s137 = sphi 0, %s134
      %s138 = sphi 0, %s137
      %s154 = sphi 0, %s138
    $region4: #{tpu_custom_call.1} parent=1 // loop_header_branch
      %17 = sbr.rel (%p15) target = $region8
    $region5: #{tpu_custom_call.1} parent=1 // loop_body
      %s19 = ssub.s32 %s14, 1
      %s20 = ssub.s32 %s14, 2
      %s21 = sadd.s32 %s14, 1
      %s22 = ssub.s32 %s14, %s21
      %p23 = scmp.eq.s32.totalorder %s22, 0
      %s25 = sadd.s32 %s24, 1
      %s26 = scalar_select %p23, %s24, %s25
      %p29 = pneg %p23
      %p30 = scmp.eq.s32.totalorder %s14, 1
      %p31 = por %p29, %p30
      %p32 = scmp.ne.s32.totalorder %s24, %s27
      %p33 = scmp.eq.s32.totalorder %s14, 0
      %p34 = por %p32, %p33
      %p35 = scmp.ne.s32.totalorder %s24, %s27
      %p36 = scmp.eq.s32.totalorder %s19, 1
      %p37 = por %p35, %p36
      %p38 = scmp.ne.s32.totalorder %s27, %s28
      %p39 = scmp.eq.s32.totalorder %s19, 0
      %p40 = por %p38, %p39
      %p41 = scmp.ne.s32.totalorder %s27, %s28
      %p42 = scmp.eq.s32.totalorder %s20, 1
      %p43 = por %p41, %p42
      %p45 = scmp.ne.s32.totalorder %s28, %s44
      %p46 = scmp.eq.s32.totalorder %s20, 0
      %p47 = por %p45, %p46
      %s49 = sadd.s32 %s48, 1
      %p52 = scmp.eq.s32.totalorder %s14, 1
      %p53 = scmp.ne.s32.totalorder %s48, %s50
      %p54 = scmp.eq.s32.totalorder %s14, 0
      %p55 = por %p53, %p54
      %p56 = scmp.ne.s32.totalorder %s48, %s50
      %p57 = scmp.eq.s32.totalorder %s19, 1
      %p58 = por %p56, %p57
      %p59 = scmp.ne.s32.totalorder %s50, %s51
      %p60 = scmp.eq.s32.totalorder %s19, 0
      %p61 = por %p59, %p60
      %p62 = scmp.ne.s32.totalorder %s50, %s51
      %p63 = scmp.eq.s32.totalorder %s20, 1
      %p64 = por %p62, %p63
      %p66 = scmp.ne.s32.totalorder %s51, %s65
      %p67 = scmp.eq.s32.totalorder %s20, 0
      %p68 = por %p66, %p67
      %s70 = sadd.s32 %s69, 1
      %p73 = scmp.eq.s32.totalorder %s14, 1
      %p74 = scmp.ne.s32.totalorder %s69, %s71
      %p75 = scmp.eq.s32.totalorder %s14, 0
      %p76 = por %p74, %p75
      %p77 = scmp.ne.s32.totalorder %s69, %s71
      %p78 = scmp.eq.s32.totalorder %s19, 1
      %p79 = por %p77, %p78
      %p80 = scmp.ne.s32.totalorder %s71, %s72
      %p81 = scmp.eq.s32.totalorder %s19, 0
      %p82 = por %p80, %p81
      %p83 = scmp.ne.s32.totalorder %s71, %s72
      %p84 = scmp.eq.s32.totalorder %s20, 1
      %p85 = por %p83, %p84
      %p87 = scmp.ne.s32.totalorder %s72, %s86
      %p88 = scmp.eq.s32.totalorder %s20, 0
      %p89 = por %p87, %p88
      %s91 = sadd.s32 %s90, 1
      %p94 = scmp.eq.s32.totalorder %s14, 1
      %p95 = scmp.ne.s32.totalorder %s90, %s92
      %p96 = scmp.eq.s32.totalorder %s14, 0
      %p97 = por %p95, %p96
      %p98 = scmp.ne.s32.totalorder %s90, %s92
      %p99 = scmp.eq.s32.totalorder %s19, 1
      %p100 = por %p98, %p99
      %p101 = scmp.ne.s32.totalorder %s92, %s93
      %p102 = scmp.eq.s32.totalorder %s19, 0
      %p103 = por %p101, %p102
      %p104 = scmp.ne.s32.totalorder %s92, %s93
      %p105 = scmp.eq.s32.totalorder %s20, 1
      %p106 = por %p104, %p105
      %p108 = scmp.ne.s32.totalorder %s93, %s107
      %p109 = scmp.eq.s32.totalorder %s20, 0
      %p110 = por %p108, %p109
      %s112 = sadd.s32 %s111, 1
      %p115 = scmp.eq.s32.totalorder %s14, 1
      %p116 = scmp.ne.s32.totalorder %s111, %s113
      %p117 = scmp.eq.s32.totalorder %s14, 0
      %p118 = por %p116, %p117
      %p119 = scmp.ne.s32.totalorder %s111, %s113
      %p120 = scmp.eq.s32.totalorder %s19, 1
      %p121 = por %p119, %p120
      %p122 = scmp.ne.s32.totalorder %s113, %s114
      %p123 = scmp.eq.s32.totalorder %s19, 0
      %p124 = por %p122, %p123
      %p125 = scmp.ne.s32.totalorder %s113, %s114
      %p126 = scmp.eq.s32.totalorder %s20, 1
      %p127 = por %p125, %p126
      %p129 = scmp.ne.s32.totalorder %s114, %s128
      %p130 = scmp.eq.s32.totalorder %s20, 0
      %p131 = por %p129, %p130
      %s132 = ssub.s32 %s14, %s21
      %p133 = scmp.eq.s32.totalorder %s132, 0
      %s135 = sadd.s32 %s134, 1
      %s136 = scalar_select %p133, %s134, %s135
      %p139 = pneg %p133
      %p140 = scmp.eq.s32.totalorder %s14, 1
      %p141 = por %p139, %p140
      %p142 = scmp.ne.s32.totalorder %s134, %s137
      %p143 = scmp.eq.s32.totalorder %s14, 0
      %p144 = por %p142, %p143
      %p145 = scmp.ne.s32.totalorder %s134, %s137
      %p146 = scmp.eq.s32.totalorder %s19, 1
      %p147 = por %p145, %p146
      %p148 = scmp.ne.s32.totalorder %s137, %s138
      %p149 = scmp.eq.s32.totalorder %s19, 0
      %p150 = por %p148, %p149
      %p151 = scmp.ne.s32.totalorder %s137, %s138
      %p152 = scmp.eq.s32.totalorder %s20, 1
      %p153 = por %p151, %p152
      %p155 = scmp.ne.s32.totalorder %s138, %s154
      %p156 = scmp.eq.s32.totalorder %s20, 0
      %p157 = por %p155, %p156
      %p158 = scmp.le.s32.totalorder 1, %s14
      %p159 = scmp.lt.s32.totalorder %s14, 3
      %p160 = pnand %p158, %p159
      %p161 = pneg %p160
      // Predicated region
      $region9: #{tpu_custom_call.1} parent=5 // pred_check
        _
      $region10: #{tpu_custom_call.1} parent=5 // pred_check_branch
        %163 = sbr.rel (%p160) target = $region12
      $region11: #{tpu_custom_call.1} parent=5 // pred_region
        %s164 = ssub.s32 %s14, 1
        // Predicated region
        $region13: #{tpu_custom_call.1} parent=11 // pred_check
          %p165 = pneg %p61
        $region14: #{tpu_custom_call.1} parent=11 // pred_check_branch
          %167 = sbr.rel (%p165) target = $region16
        $region15: #{tpu_custom_call.1} parent=11 // pred_region
          _
        $region16: #{tpu_custom_call.1} parent=11 // pred_fallthru
          _
        // Predicated region
        $region17: #{tpu_custom_call.1} parent=11 // pred_check
          %p168 = pneg %p82
        $region18: #{tpu_custom_call.1} parent=11 // pred_check_branch
          %170 = sbr.rel (%p168) target = $region20
        $region19: #{tpu_custom_call.1} parent=11 // pred_region
          _
        $region20: #{tpu_custom_call.1} parent=11 // pred_fallthru
          _
        // Predicated region
        $region21: #{tpu_custom_call.1} parent=11 // pred_check
          %p171 = pneg %p103
        $region22: #{tpu_custom_call.1} parent=11 // pred_check_branch
          %173 = sbr.rel (%p171) target = $region24
        $region23: #{tpu_custom_call.1} parent=11 // pred_region
          _
        $region24: #{tpu_custom_call.1} parent=11 // pred_fallthru
          _
        // Predicated region
        $region25: #{tpu_custom_call.1} parent=11 // pred_check
          %p174 = pneg %p124
        $region26: #{tpu_custom_call.1} parent=11 // pred_check_branch
          %176 = sbr.rel (%p174) target = $region28
        $region27: #{tpu_custom_call.1} parent=11 // pred_region
          _
        $region28: #{tpu_custom_call.1} parent=11 // pred_fallthru
          _
      $region12: #{tpu_custom_call.1} parent=5 // pred_fallthru
        _
      %p177 = scmp.lt.s32.totalorder %s14, 2
      // Predicated region
      $region29: #{tpu_custom_call.1} parent=5 // pred_check
        %p178 = pneg %p177
      $region30: #{tpu_custom_call.1} parent=5 // pred_check_branch
        %180 = sbr.rel (%p178) target = $region32
      $region31: #{tpu_custom_call.1} parent=5 // pred_region
        // Predicated region
        $region33: #{tpu_custom_call.1} parent=31 // pred_check
          %p181 = pneg %p34
        $region34: #{tpu_custom_call.1} parent=31 // pred_check_branch
          %183 = sbr.rel (%p181) target = $region36
        $region35: #{tpu_custom_call.1} parent=31 // pred_region
          %p184 = scmp.lt.s32.totalorder %s14, 1
          %s185 = scalar_select %p184, %s14, 1
          %s186 = smul.addr %s185, 8
          %s187 = scalar_lea.vmem %s0, %s186
        $region36: #{tpu_custom_call.1} parent=31 // pred_fallthru
          _
      $region32: #{tpu_custom_call.1} parent=5 // pred_fallthru
        _
      %p188 = scmp.le.s32.totalorder 1, %s14
      %p189 = scmp.lt.s32.totalorder %s14, 3
      %p190 = pnand %p188, %p189
      %p191 = pneg %p190
      // Predicated region
      $region37: #{tpu_custom_call.1} parent=5 // pred_check
        _
      $region38: #{tpu_custom_call.1} parent=5 // pred_check_branch
        %193 = sbr.rel (%p190) target = $region40
      $region39: #{tpu_custom_call.1} parent=5 // pred_region
        %s194 = ssub.s32 %s14, 1
        %p195 = scmp.lt.s32.totalorder %s19, 1
        %s196 = scalar_select %p195, %s19, 1
        %s197 = smul.addr %s196, 8
        %s198 = scalar_lea.vmem %s0, %s197
        %p199 = pneg %p40
        %p200 = pneg %p37
        %p201 = pneg %p61
        %p202 = pneg %p58
        %p203 = pneg %p82
        %p204 = pneg %p79
        %p205 = pneg %p103
        %p206 = pneg %p100
        %p207 = pneg %p124
        %p208 = pneg %p121
        %p209 = pneg %p150
        %p210 = pneg %p147
        %s211 = sand.u32 %s137, 1
        %s212 = scalar_lea.sflag [#allocation3], %s211
        %s213 = sand.u32 %s137, 1
        %s214 = smul.addr %s213, 8
        %s215 = scalar_lea.vmem [#allocation2], %s214
        %p216 = scmp.lt.s32.totalorder %s19, 1
        %s217 = scalar_select %p216, %s19, 1
        %s218 = smul.addr %s217, 8
        %s219 = scalar_lea.vmem %s0, %s218
        %v220 = vld [vmem:[%s219] sm:$0xff]
        %v221 = vld [vmem:[%s1] sm:$0xff]
        %v222 = vld [vmem:[%s1 + $0x8] sm:$0xff]
        %v223 = vld [vmem:[%s2] sm:$0x1]
        %v225 = vperm.slane %v223, 0
        %vm227 = vcmask 130048
        %v229 = vsel %vm227, %v220, 0
        %231 = vmatpush.msra.mxu0 0.0
        %232 = vmatpush.msra.mxu0 0.0
        %233 = vmatpush.msra.mxu0 0.0
        %234 = vmatpush.msra.mxu0 0.0
        %235 = vmatpush.msra.mxu0 0.0
        %236 = vmatpush.msra.mxu0 0.0
        %237 = vmatpush.msra.mxu0 0.0
        %238 = vmatpush.msra.mxu0 0.0
        %239 = vmatpush.msra.mxu0 0.0
        %240 = vmatpush.msra.mxu0 0.0
        %241 = vmatpush.msra.mxu0 0.0
        %242 = vmatpush.msra.mxu0 0.0
        %243 = vmatpush.msra.mxu0 0.0
        %244 = vmatpush.msra.mxu0 0.0
        %245 = vmatpush.msra.mxu0 %v222
        %246 = vmatpush.msra.mxu0 %v221
        %247 = vmatmul.f32.gmra.mxu0 %v229
        %v248 = vpop.f32.mrf.mxu0
        %v249 = vadd.f32 %v225, %v248
        %250 = vdwg.mxu0
        %v251 = vmul.f32 %v249, 0.5
        %v252 = vmul.f32 %v249, 0.70710677
        %v253 = vmul.f32 %v252, %v252
        %v254 = vmin.f32 16.0, %v253
        %v255 = vmul.f32 %v254, 2.1237322e-06
        %v256 = vadd.f32 %v255, 0.00028619796
        %v257 = vmul.f32 %v254, %v256
        %v258 = vadd.f32 %v257, 0.0036580483
        %v259 = vmul.f32 %v254, %v258
        %v260 = vadd.f32 %v259, 0.05243302
        %v261 = vmul.f32 %v254, %v260
        %v262 = vadd.f32 %v261, 0.18741608
        %v263 = vmul.f32 %v254, %v262
        %v264 = vadd.f32 %v263, 1.1283791
        %v265 = vmul.f32 %v252, %v264
        %v266 = vmul.f32 %v254, 3.8918573e-05
        %v267 = vadd.f32 %v266, 0.001143296
        %v268 = vmul.f32 %v254, %v267
        %v269 = vadd.f32 %v268, 0.014752088
        %v270 = vmul.f32 %v254, %v269
        %v271 = vadd.f32 %v270, 0.112945676
        %v272 = vmul.f32 %v254, %v271
        %v273 = vadd.f32 %v272, 0.4994258
        %v274 = vmul.f32 %v254, %v273
        %v275 = vadd.f32 %v274, 1.0
        %v276 = vrcp.pop %v275
        %v277 = vmul.f32 %v275, %v276
        %v278 = vsub.f32 1.0, %v277
        %v279 = vmul.f32 %v276, %v278
        %v280 = vadd.f32 %v276, %v279
        %vm281 = vweird.f32 %v275
        %vm282 = vweird.f32 %v276
        %vm283 = vmor %vm281, %vm282
        %v284 = vsel %vm283, %v276, %v280
        %v285 = vand.u32 2147483647, %v275
        %vm286 = vcmp.eq.f32.partialorder %v285, 8.507059e+37
        %v287 = vand.u32 %v275, 2147483648
        %v288 = vor.u32 1.1754944e-38, %v287
        %v289 = vsel %vm286, %v288, %v284
        %v290 = vmul.f32 %v265, %v289
        %v291 = vmin.f32 %v290, 1.0
        %v292 = vmax.f32 %v291, -1.0
        %v293 = vadd.f32 %v292, 1.0
        %v294 = vmul.f32 %v251, %v293
        %v295 = vld [vmem:[%s3] sm:$0xff]
        %v296 = vld [vmem:[%s3 + $0x8] sm:$0xff]
        %v297 = vld [vmem:[%s3 + $0x10] sm:$0xff]
        %v298 = vld [vmem:[%s3 + $0x18] sm:$0xff]
        %v299 = vld [vmem:[%s4] sm:$0x1]
        %v301 = vperm.slane %v299, 0
        %vm303 = vcmask 261120
        %v305 = vsel %vm303, %v294, 0
        %307 = vmatpush.msra.mxu0 0.0
        %308 = vmatpush.msra.mxu0 0.0
        %309 = vmatpush.msra.mxu0 0.0
        %310 = vmatpush.msra.mxu0 0.0
        %311 = vmatpush.msra.mxu0 0.0
        %312 = vmatpush.msra.mxu0 0.0
        %313 = vmatpush.msra.mxu0 0.0
        %314 = vmatpush.msra.mxu0 0.0
        %315 = vmatpush.msra.mxu0 0.0
        %316 = vmatpush.msra.mxu0 0.0
        %317 = vmatpush.msra.mxu0 0.0
        %318 = vmatpush.msra.mxu0 0.0
        %319 = vmatpush.msra.mxu0 %v298
        %320 = vmatpush.msra.mxu0 %v297
        %321 = vmatpush.msra.mxu0 %v296
        %322 = vmatpush.msra.mxu0 %v295
        %323 = vmatmul.f32.gmra.mxu0 %v305
        %v324 = vpop.f32.mrf.mxu0
        %v325 = vadd.f32 %v301, %v324
        %326 = vdwg.mxu0
        %327 = vst.msk [vmem:[%s215] sm:$0xff] %vm227, %v325
        %s328 = sand.u32 %s137, 1
        %s329 = scalar_lea.sflag [#allocation3], %s328
        %s330 = sand.u32 %s137, 1
        %s331 = smul.addr %s330, 8
        %s332 = scalar_lea.vmem [#allocation2], %s331
        // Predicated region
        $region41: #{tpu_custom_call.1} parent=39 // pred_check
          %p333 = pneg %p147
        $region42: #{tpu_custom_call.1} parent=39 // pred_check_branch
          %335 = sbr.rel (%p333) target = $region44
        $region43: #{tpu_custom_call.1} parent=39 // pred_region
          %337 = vsyncadd %s329, 0
          %s338 = smul.addr %s19, 8
          %s339 = scalar_lea.hbm %s5, %s338
          %s341 = sshll.u32 %s332, 4
          %s342 = int_to_ptr.vmem [resolvable:$true] %s341
          %s343 = sshll.u32 %s339, 4
          %s344 = int_to_ptr.hbm [resolvable:$true] %s343
          %346 = dma.vmem_to_hbm [thread:$0]  %s342, 128, %s344, %s329
        $region44: #{tpu_custom_call.1} parent=39 // pred_fallthru
          _
      $region40: #{tpu_custom_call.1} parent=5 // pred_fallthru
        _
      %p347 = scmp.le.s32.totalorder 2, %s14
      // Predicated region
      $region45: #{tpu_custom_call.1} parent=5 // pred_check
        %p348 = pneg %p347
      $region46: #{tpu_custom_call.1} parent=5 // pred_check_branch
        %350 = sbr.rel (%p348) target = $region48
      $region47: #{tpu_custom_call.1} parent=5 // pred_region
        %s351 = ssub.s32 %s14, 2
        // Predicated region
        $region49: #{tpu_custom_call.1} parent=47 // pred_check
          %p352 = pneg %p153
        $region50: #{tpu_custom_call.1} parent=47 // pred_check_branch
          %354 = sbr.rel (%p352) target = $region52
        $region51: #{tpu_custom_call.1} parent=47 // pred_region
          %s355 = sand.u32 %s138, 1
          %s356 = scalar_lea.sflag [#allocation3], %s355
          %s357 = sand.u32 %s138, 1
          %s358 = smul.addr %s357, 8
          %s359 = scalar_lea.vmem [#allocation2], %s358
          %361 = dma.done %s356, 128
        $region52: #{tpu_custom_call.1} parent=47 // pred_fallthru
          _
      $region48: #{tpu_custom_call.1} parent=5 // pred_fallthru
        _
    $region6: #{tpu_custom_call.1} parent=1 // loop_footer
      %s18 = sadd.s32 1, %s14
    $region7: #{tpu_custom_call.1} parent=1 // loop_footer_branch
      %13 = sbr.rel target = $region3
    $region8: #{tpu_custom_call.1} parent=1 // loop_exit
      _
    %362 = vsyncpa [#allocation3], 1
    %s363 = scalar_lea.sflag [#allocation3], 1
    %364 = vsyncpa %s363, 1

</llo_original>
